<compile_context>
chip_gen: v6e
topology: v6e:2x2x1
jax: 0.10.0
libtpu: 0.0.40
codegen_flags: <defaults>
</compile_context>

<pallas_src>
import jax
import jax.numpy as jnp
from jax.experimental import pallas as pl
from jax.experimental.pallas import tpu as pltpu


def _round_up(n, m):
    return (n + m - 1) // m * m


def _cdiv(a, b):
    return (a + b - 1) // b


def _pad2(a, rows, cols):
    pr, pc = rows - a.shape[0], cols - a.shape[1]
    if pr == 0 and pc == 0:
        return a
    return jnp.pad(a, ((0, pr), (0, pc)))


def _vmem_capacity_bytes():
    """Physical per-core VMEM, with a v7x-safe fallback (64 MiB)."""
    try:
        info = pltpu.get_tpu_info()
        for attr in ("vmem_capacity_bytes", "vmem_size_bytes", "vmem_bytes"):
            cap = getattr(info, attr, None)
            if cap:
                return int(cap)
    except Exception:
        pass
    return 64 * 2**20


def rbf_kernel(x_ref, scale_ref, shift_ref, cn_ref, c_ref, wt_ref, b_ref,
               o_ref, acc_ref):
    c_idx = pl.program_id(1)

    @pl.when(c_idx == 0)
    def _():
        acc_ref[...] = jnp.zeros_like(acc_ref)

    # Folded BatchNorm (batch stats hoisted in the wrapper): f32 VPU elementwise.
    xn = x_ref[...].astype(jnp.float32) * scale_ref[...] + shift_ref[...]   # (bt, D_p)

    # Squared distance to each center, MXU-friendly expansion:
    #   dist[b, c] = ||xn_b||^2 - 2 xn_b . c_c + ||c_c||^2 = -2 * h[b, c]
    half_x_sq = 0.5 * jnp.sum(xn * xn, axis=1, keepdims=True)               # (bt, 1)
    cross = jnp.dot(xn.astype(jnp.bfloat16), c_ref[...],                    # bf16 MXU, f32 acc
                    preferred_element_type=jnp.float32)                     # (bt, ct)
    h = cross - half_x_sq - cn_ref[...]                                     # = -dist / 2

    # phi(dist) = exp(-dist^2) = exp(-4 h^2)    (EUP transcendental, f32)
    phi = jnp.exp(-4.0 * (h * h))                                           # (bt, ct)

    # Linear partial sum: phi @ W^T accumulated over center tiles (bf16 MXU, f32 acc)
    acc_ref[...] += jnp.dot(phi.astype(jnp.bfloat16), wt_ref[...],
                            preferred_element_type=jnp.float32)             # (bt, O_p)

    @pl.when(c_idx == pl.num_programs(1) - 1)
    def _():
        o_ref[...] = (acc_ref[...] + b_ref[...]).astype(o_ref.dtype)


def rbf_forward(x, centers, gamma, beta, weight, bias, *, eps=1e-5,
                batch_tile=512, center_tile=2048):
    """RBF module forward: x (B, D) -> (B, O)."""
    orig_dtype = x.dtype
    B, D = x.shape
    C = centers.shape[1]
    O = weight.shape[0]

    use_16bit_io = (jnp.issubdtype(orig_dtype, jnp.floating)
                    and orig_dtype.itemsize == 2)
    out_dtype = orig_dtype if use_16bit_io else jnp.float32
    x_item = 2 if use_16bit_io else 4
    out_item = x_item

    xf = x.astype(jnp.float32)
    # --- BatchNorm1d training-mode batch statistics (biased variance), hoisted so
    #     the batch axis can be tiled/parallelized; mean and E[x^2] in one pass.
    mean = jnp.mean(xf, axis=0, keepdims=True)                              # (1, D)
    mean_sq = jnp.mean(xf * xf, axis=0, keepdims=True)                      # (1, D)
    var = jnp.maximum(mean_sq - mean * mean, 0.0)
    bn_scale = gamma.astype(jnp.float32).reshape(1, D) * jax.lax.rsqrt(var + eps)
    bn_shift = beta.astype(jnp.float32).reshape(1, D) - mean * bn_scale

    # --- per-center squared norms, hoisted out of the kernel (f32, tiny).
    c32 = centers.astype(jnp.float32)
    half_c_sq = 0.5 * jnp.sum(c32 * c32, axis=0, keepdims=True)             # (1, C)

    # --- lane-dense padding and tile selection.
    D_p = _round_up(D, 128)
    O_p = _round_up(O, 128)
    C_128 = _round_up(C, 128)
    B8 = _round_up(B, 8)

    # >= 2 batch grid steps when possible (megacore / v7x dual-TC sharding).
    bt = max(8, min(_round_up(batch_tile, 8), _round_up(_cdiv(B8, 2), 8)))
    ct = max(128, min(_round_up(center_tile, 128), C_128))

    cap = _vmem_capacity_bytes()
    usable = cap - max(8 * 2**20, cap // 8)    # ~56 MiB on v7x, ~112 MiB on v5e/v6e

    def vmem_est(bt_, ct_):
        stream = 2 * bt_ * (D_p * x_item + O_p * out_item)        # x / out, double-buffered
        weights = 2 * (2 * (D_p * ct_ + ct_ * O_p) + 4 * ct_)     # centers, W^T (bf16), ||c||^2
        consts = 2 * 4 * (2 * D_p + O_p)                          # bn scale/shift, bias
        scratch = 4 * bt_ * O_p                                   # f32 accumulator
        temps = 4 * bt_ * (D_p + 3 * ct_ + 8)                     # xn, cross/h/phi temporaries
        return stream + weights + consts + scratch + temps

    # Shrink whichever dimension dominates VMEM until the estimate fits.
    while vmem_est(bt, ct) > usable:
        w_bytes = 2 * 2 * (D_p * ct + ct * O_p) + 4 * 4 * bt * ct
        s_bytes = 2 * bt * (D_p * x_item + O_p * out_item) + 4 * bt * D_p
        if ct > 128 and w_bytes >= s_bytes:
            ct = max(128, _round_up(ct // 2, 128))
        elif bt > 8:
            bt = max(8, _round_up(bt // 2, 8))
        elif ct > 128:
            ct = max(128, _round_up(ct // 2, 128))
        else:
            break

    B_p = _round_up(B8, bt)
    C_p = _round_up(C_128, ct)
    n_b, n_c = B_p // bt, C_p // ct
    vmem_limit = int(min(usable, max(32 * 2**20, int(1.5 * vmem_est(bt, ct)))))

    # Zero padding is semantically safe everywhere: padded D lanes contribute 0,
    # padded C columns hit zero W^T rows, padded B rows / O columns are sliced off.
    x_ship = x if use_16bit_io else xf
    xp = _pad2(x_ship, B_p, D_p)                                            # (B_p, D_p)
    sc = _pad2(bn_scale, 1, D_p)                                            # (1, D_p) f32
    sh = _pad2(bn_shift, 1, D_p)                                            # (1, D_p) f32
    cnp = _pad2(half_c_sq, 1, C_p)                                          # (1, C_p) f32
    cp = _pad2(centers.astype(jnp.bfloat16), D_p, C_p)                      # (D_p, C_p) bf16
    wtp = _pad2(weight.astype(jnp.bfloat16).T, C_p, O_p)                    # (C_p, O_p) bf16
    bp = _pad2(bias.astype(jnp.float32).reshape(1, O), 1, O_p)              # (1, O_p) f32

    single_c = n_c == 1

    def _build(use_pipeline_mode):
        def spec(shape, imap, grid_constant):
            if use_pipeline_mode and grid_constant:
                # Grid-invariant block: single-buffer to halve its VMEM footprint.
                return pl.BlockSpec(shape, imap, pipeline_mode=pl.Buffered(1))
            return pl.BlockSpec(shape, imap)

        in_specs = [
            spec((bt, D_p), lambda i, c: (i, 0), False),       # x tile
            spec((1, D_p), lambda i, c: (0, 0), True),         # folded BN scale
            spec((1, D_p), lambda i, c: (0, 0), True),         # folded BN shift
            spec((1, ct), lambda i, c: (0, c), single_c),      # 0.5*||center||^2
            spec((D_p, ct), lambda i, c: (0, c), single_c),    # centers (bf16)
            spec((ct, O_p), lambda i, c: (c, 0), single_c),    # linear W^T (bf16)
            spec((1, O_p), lambda i, c: (0, 0), True),         # linear bias
        ]
        grid_spec = pltpu.PrefetchScalarGridSpec(
            num_scalar_prefetch=0,
            grid=(n_b, n_c),
            in_specs=in_specs,
            out_specs=pl.BlockSpec((bt, O_p), lambda i, c: (i, 0)),
            scratch_shapes=[pltpu.VMEM((bt, O_p), jnp.float32)],
        )
        return pl.pallas_call(
            rbf_kernel,
            out_shape=jax.ShapeDtypeStruct((B_p, O_p), out_dtype),
            grid_spec=grid_spec,
            compiler_params=pltpu.CompilerParams(
                dimension_semantics=("parallel", "arbitrary"),
                vmem_limit_bytes=vmem_limit,
            ),
        )

    args = (xp, sc, sh, cnp, cp, wtp, bp)
    try:
        out = _build(True)(*args)
    except Exception:
        # pipeline_mode unsupported on this Pallas version -> default buffering.
        out = _build(False)(*args)

    return out[:B, :O].astype(orig_dtype)


if __name__ == "__main__":
    # Small shapes consistent with the module: (batch, input_size) -> (batch, output_size)
    B, D, C, O = 8, 8, 16, 8   # batch, input_size, n_centers, output_size

    key = jax.random.PRNGKey(0)
    k1, k2, k3, k4, k5, k6 = jax.random.split(key, 6)

    x = jax.random.normal(k1, (B, D), jnp.float32)
    # Parameters scaled so distances are O(1) and phi is non-degenerate
    # (exercises the whole chain instead of exp(-large) ~ 0).
    centers = 0.25 * jax.random.normal(k2, (D, C), jnp.float32)
    gamma = jax.random.uniform(k3, (D,), jnp.float32, 0.2, 0.5)      # BN weight
    beta = 0.1 * jax.random.normal(k4, (D,), jnp.float32)            # BN bias
    bound = 1.0 / float(C) ** 0.5
    weight = jax.random.uniform(k5, (O, C), jnp.float32, -bound, bound)  # nn.Linear weight
    bias = jax.random.uniform(k6, (O,), jnp.float32, -bound, bound)      # nn.Linear bias

    out = jax.block_until_ready(rbf_forward(x, centers, gamma, beta, weight, bias))

    # Pure-JAX reference (direct broadcast form, mirroring the PyTorch module).
    mean = jnp.mean(x, axis=0, keepdims=True)
    var = jnp.mean((x - mean) ** 2, axis=0, keepdims=True)
    xn = (x - mean) / jnp.sqrt(var + 1e-5) * gamma + beta
    dist = jnp.sum((xn[:, :, None] - centers[None, :, :]) ** 2, axis=1)
    ref = jnp.exp(-dist ** 2) @ weight.T + bias

    assert out.shape == (B, O), out.shape
    # bf16 MXU operands -> relaxed tolerance vs. the all-f32 reference.
    assert jnp.allclose(out, ref, rtol=2e-2, atol=2e-2), float(jnp.max(jnp.abs(out - ref)))
    print("KERNEL_OK")
</pallas_src>

<mosaic_0001>
module attributes {stable_mosaic.version = 11 : i64} {
  func.func @rbf_kernel(%arg0: i32, %arg1: i32, %arg2: memref<8x128xf32, #tpu.memory_space<vmem>>, %arg3: memref<1x128xf32, #tpu.memory_space<vmem>>, %arg4: memref<1x128xf32, #tpu.memory_space<vmem>>, %arg5: memref<1x128xf32, #tpu.memory_space<vmem>>, %arg6: memref<128x128xbf16, #tpu.memory_space<vmem>>, %arg7: memref<128x128xbf16, #tpu.memory_space<vmem>>, %arg8: memref<1x128xf32, #tpu.memory_space<vmem>>, %arg9: memref<8x128xf32, #tpu.memory_space<vmem>>, %arg10: memref<8x128xf32, #tpu.memory_space<vmem>>) attributes {dimension_semantics = [#tpu.dimension_semantics<parallel>, #tpu.dimension_semantics<arbitrary>], iteration_bounds = array<i64: 1, 1>, scalar_prefetch = 0 : i64, scratch_operands = 1 : i64, tpu.core_type = #tpu.core_type<tc>, window_params = [{transform_indices = @transform_0, window_bounds = array<i64: 8, 128>}, {pipeline_mode = #tpu.pipeline_mode<synchronous>, transform_indices = @transform_1, window_bounds = array<i64: 1, 128>}, {pipeline_mode = #tpu.pipeline_mode<synchronous>, transform_indices = @transform_2, window_bounds = array<i64: 1, 128>}, {pipeline_mode = #tpu.pipeline_mode<synchronous>, transform_indices = @transform_3, window_bounds = array<i64: 1, 128>}, {pipeline_mode = #tpu.pipeline_mode<synchronous>, transform_indices = @transform_4, window_bounds = array<i64: 128, 128>}, {pipeline_mode = #tpu.pipeline_mode<synchronous>, transform_indices = @transform_5, window_bounds = array<i64: 128, 128>}, {pipeline_mode = #tpu.pipeline_mode<synchronous>, transform_indices = @transform_6, window_bounds = array<i64: 1, 128>}, {transform_indices = @transform_7, window_bounds = array<i64: 8, 128>}]} {
    %c0_i32 = arith.constant 0 : i32
    %0 = arith.cmpi eq, %arg1, %c0_i32 : i32
    %1 = arith.extui %0 : i1 to i32
    %c0_i32_0 = arith.constant 0 : i32
    %2 = arith.cmpi ne, %1, %c0_i32_0 : i32
    scf.if %2 {
      %cst_22 = arith.constant 0.000000e+00 : f32
      %36 = vector.broadcast %cst_22 : f32 to vector<8x128xf32>
      %c0_23 = arith.constant 0 : index
      %c0_24 = arith.constant 0 : index
      %37 = vector.load %arg10[%c0_23, %c0_24] : memref<8x128xf32, #tpu.memory_space<vmem>>, vector<8x128xf32>
      tpu.vector_store %arg10[%c0_23, %c0_24], %36 {strides = array<i32>} : memref<8x128xf32, #tpu.memory_space<vmem>>, vector<8x128xf32>,
    } else {
    }
    %c0 = arith.constant 0 : index
    %c0_1 = arith.constant 0 : index
    %3 = vector.load %arg2[%c0, %c0_1] : memref<8x128xf32, #tpu.memory_space<vmem>>, vector<8x128xf32>
    %c0_2 = arith.constant 0 : index
    %c0_3 = arith.constant 0 : index
    %4 = vector.load %arg3[%c0_2, %c0_3] : memref<1x128xf32, #tpu.memory_space<vmem>>, vector<1x128xf32>
    %5 = vector.broadcast %4 : vector<1x128xf32> to vector<8x128xf32>
    %6 = arith.mulf %3, %5 : vector<8x128xf32>
    %c0_4 = arith.constant 0 : index
    %c0_5 = arith.constant 0 : index
    %7 = vector.load %arg4[%c0_4, %c0_5] : memref<1x128xf32, #tpu.memory_space<vmem>>, vector<1x128xf32>
    %8 = vector.broadcast %7 : vector<1x128xf32> to vector<8x128xf32>
    %9 = arith.addf %6, %8 : vector<8x128xf32>
    %10 = arith.mulf %9, %9 : vector<8x128xf32>
    %cst = arith.constant dense<0.000000e+00> : vector<8xf32>
    %11 = vector.multi_reduction <add>, %10, %cst [1] : vector<8x128xf32> to vector<8xf32>
    %12 = vector.shape_cast %11 : vector<8xf32> to vector<8x1xf32>
    %cst_6 = arith.constant 5.000000e-01 : f32
    %13 = vector.broadcast %cst_6 : f32 to vector<8x1xf32>
    %14 = arith.mulf %13, %12 : vector<8x1xf32>
    %15 = arith.truncf %9 : vector<8x128xf32> to vector<8x128xbf16>
    %c0_7 = arith.constant 0 : index
    %c0_8 = arith.constant 0 : index
    %16 = vector.load %arg6[%c0_7, %c0_8] : memref<128x128xbf16, #tpu.memory_space<vmem>>, vector<128x128xbf16>
    %cst_9 = arith.constant dense<0.000000e+00> : vector<8x128xf32>
    %17 = tpu.matmul %15, %16, %cst_9 {dimension_numbers = #tpu.dot_dimension_numbers<[1], [0], [0], [1], [0, 0, 1, 1], [], []>} : vector<8x128xbf16>, vector<128x128xbf16>, vector<8x128xf32> -> vector<8x128xf32>
    %18 = vector.broadcast %14 : vector<8x1xf32> to vector<8x128xf32>
    %19 = arith.subf %17, %18 : vector<8x128xf32>
    %c0_10 = arith.constant 0 : index
    %c0_11 = arith.constant 0 : index
    %20 = vector.load %arg5[%c0_10, %c0_11] : memref<1x128xf32, #tpu.memory_space<vmem>>, vector<1x128xf32>
    %21 = vector.broadcast %20 : vector<1x128xf32> to vector<8x128xf32>
    %22 = arith.subf %19, %21 : vector<8x128xf32>
    %23 = arith.mulf %22, %22 : vector<8x128xf32>
    %cst_12 = arith.constant -4.000000e+00 : f32
    %24 = vector.broadcast %cst_12 : f32 to vector<8x128xf32>
    %25 = arith.mulf %24, %23 : vector<8x128xf32>
    %26 = math.exp %25 : vector<8x128xf32>
    %c0_13 = arith.constant 0 : index
    %c0_14 = arith.constant 0 : index
    %27 = vector.load %arg10[%c0_13, %c0_14] : memref<8x128xf32, #tpu.memory_space<vmem>>, vector<8x128xf32>
    %28 = arith.truncf %26 : vector<8x128xf32> to vector<8x128xbf16>
    %c0_15 = arith.constant 0 : index
    %c0_16 = arith.constant 0 : index
    %29 = vector.load %arg7[%c0_15, %c0_16] : memref<128x128xbf16, #tpu.memory_space<vmem>>, vector<128x128xbf16>
    %cst_17 = arith.constant dense<0.000000e+00> : vector<8x128xf32>
    %30 = tpu.matmul %28, %29, %cst_17 {dimension_numbers = #tpu.dot_dimension_numbers<[1], [0], [0], [1], [0, 0, 1, 1], [], []>} : vector<8x128xbf16>, vector<128x128xbf16>, vector<8x128xf32> -> vector<8x128xf32>
    %31 = arith.addf %27, %30 : vector<8x128xf32>
    %c0_18 = arith.constant 0 : index
    %c0_19 = arith.constant 0 : index
    %32 = vector.load %arg10[%c0_18, %c0_19] : memref<8x128xf32, #tpu.memory_space<vmem>>, vector<8x128xf32>
    tpu.vector_store %arg10[%c0_18, %c0_19], %31 {strides = array<i32>} : memref<8x128xf32, #tpu.memory_space<vmem>>, vector<8x128xf32>,
    %c0_i32_20 = arith.constant 0 : i32
    %33 = arith.cmpi eq, %arg1, %c0_i32_20 : i32
    %34 = arith.extui %33 : i1 to i32
    %c0_i32_21 = arith.constant 0 : i32
    %35 = arith.cmpi ne, %34, %c0_i32_21 : i32
    scf.if %35 {
      %c0_22 = arith.constant 0 : index
      %c0_23 = arith.constant 0 : index
      %36 = vector.load %arg10[%c0_22, %c0_23] : memref<8x128xf32, #tpu.memory_space<vmem>>, vector<8x128xf32>
      %c0_24 = arith.constant 0 : index
      %c0_25 = arith.constant 0 : index
      %37 = vector.load %arg8[%c0_24, %c0_25] : memref<1x128xf32, #tpu.memory_space<vmem>>, vector<1x128xf32>
      %38 = vector.broadcast %37 : vector<1x128xf32> to vector<8x128xf32>
      %39 = arith.addf %36, %38 : vector<8x128xf32>
      %c0_26 = arith.constant 0 : index
      %c0_27 = arith.constant 0 : index
      %40 = vector.load %arg9[%c0_26, %c0_27] : memref<8x128xf32, #tpu.memory_space<vmem>>, vector<8x128xf32>
      tpu.vector_store %arg9[%c0_26, %c0_27], %39 {strides = array<i32>} : memref<8x128xf32, #tpu.memory_space<vmem>>, vector<8x128xf32>,
    } else {
    }
    return
  }
  func.func @transform_0(%arg0: i32, %arg1: i32) -> (i32, i32) {
    %c0_i32 = arith.constant 0 : i32
    %c0_i32_0 = arith.constant 0 : i32
    return %arg0, %c0_i32 : i32, i32
  }
  func.func @transform_1(%arg0: i32, %arg1: i32) -> (i32, i32) {
    %c0_i32 = arith.constant 0 : i32
    %c0_i32_0 = arith.constant 0 : i32
    %c0_i32_1 = arith.constant 0 : i32
    return %c0_i32, %c0_i32_0 : i32, i32
  }
  func.func @transform_2(%arg0: i32, %arg1: i32) -> (i32, i32) {
    %c0_i32 = arith.constant 0 : i32
    %c0_i32_0 = arith.constant 0 : i32
    %c0_i32_1 = arith.constant 0 : i32
    return %c0_i32, %c0_i32_0 : i32, i32
  }
  func.func @transform_3(%arg0: i32, %arg1: i32) -> (i32, i32) {
    %c0_i32 = arith.constant 0 : i32
    %c0_i32_0 = arith.constant 0 : i32
    return %c0_i32, %arg1 : i32, i32
  }
  func.func @transform_4(%arg0: i32, %arg1: i32) -> (i32, i32) {
    %c0_i32 = arith.constant 0 : i32
    %c0_i32_0 = arith.constant 0 : i32
    return %c0_i32, %arg1 : i32, i32
  }
  func.func @transform_5(%arg0: i32, %arg1: i32) -> (i32, i32) {
    %c0_i32 = arith.constant 0 : i32
    %c0_i32_0 = arith.constant 0 : i32
    return %arg1, %c0_i32 : i32, i32
  }
  func.func @transform_6(%arg0: i32, %arg1: i32) -> (i32, i32) {
    %c0_i32 = arith.constant 0 : i32
    %c0_i32_0 = arith.constant 0 : i32
    %c0_i32_1 = arith.constant 0 : i32
    return %c0_i32, %c0_i32_0 : i32, i32
  }
  func.func @transform_7(%arg0: i32, %arg1: i32) -> (i32, i32) {
    %c0_i32 = arith.constant 0 : i32
    %c0_i32_0 = arith.constant 0 : i32
    return %arg0, %c0_i32 : i32, i32
  }
}

module attributes {stable_mosaic.version = 11 : i64} {
  func.func @rbf_kernel(%arg0: i32, %arg1: i32, %arg2: memref<8x128xf32, #tpu.memory_space<vmem>>, %arg3: memref<1x128xf32, #tpu.memory_space<vmem>>, %arg4: memref<1x128xf32, #tpu.memory_space<vmem>>, %arg5: memref<1x128xf32, #tpu.memory_space<vmem>>, %arg6: memref<128x128xbf16, #tpu.memory_space<vmem>>, %arg7: memref<128x128xbf16, #tpu.memory_space<vmem>>, %arg8: memref<1x128xf32, #tpu.memory_space<vmem>>, %arg9: memref<8x128xf32, #tpu.memory_space<vmem>>, %arg10: memref<8x128xf32, #tpu.memory_space<vmem>>) attributes {dimension_semantics = [#tpu.dimension_semantics<parallel>, #tpu.dimension_semantics<arbitrary>], iteration_bounds = array<i64: 1, 1>, scalar_prefetch = 0 : i64, scratch_operands = 1 : i64, tpu.core_type = #tpu.core_type<tc>, window_params = [{transform_indices = @transform_0, window_bounds = array<i64: 8, 128>}, {pipeline_mode = #tpu.pipeline_mode<synchronous>, transform_indices = @transform_1, window_bounds = array<i64: 1, 128>}, {pipeline_mode = #tpu.pipeline_mode<synchronous>, transform_indices = @transform_2, window_bounds = array<i64: 1, 128>}, {transform_indices = @transform_3, window_bounds = array<i64: 1, 128>}, {transform_indices = @transform_4, window_bounds = array<i64: 128, 128>}, {transform_indices = @transform_5, window_bounds = array<i64: 128, 128>}, {pipeline_mode = #tpu.pipeline_mode<synchronous>, transform_indices = @transform_6, window_bounds = array<i64: 1, 128>}, {transform_indices = @transform_7, window_bounds = array<i64: 8, 128>}]} {
    %c0_i32 = arith.constant 0 : i32
    %0 = arith.cmpi eq, %arg1, %c0_i32 : i32
    %1 = arith.extui %0 : i1 to i32
    %c0_i32_0 = arith.constant 0 : i32
    %2 = arith.cmpi ne, %1, %c0_i32_0 : i32
    scf.if %2 {
      %cst_22 = arith.constant 0.000000e+00 : f32
      %36 = vector.broadcast %cst_22 : f32 to vector<8x128xf32>
      %c0_23 = arith.constant 0 : index
      %c0_24 = arith.constant 0 : index
      %37 = vector.load %arg10[%c0_23, %c0_24] : memref<8x128xf32, #tpu.memory_space<vmem>>, vector<8x128xf32>
      tpu.vector_store %arg10[%c0_23, %c0_24], %36 {strides = array<i32>} : memref<8x128xf32, #tpu.memory_space<vmem>>, vector<8x128xf32>,
    } else {
    }
    %c0 = arith.constant 0 : index
    %c0_1 = arith.constant 0 : index
    %3 = vector.load %arg2[%c0, %c0_1] : memref<8x128xf32, #tpu.memory_space<vmem>>, vector<8x128xf32>
    %c0_2 = arith.constant 0 : index
    %c0_3 = arith.constant 0 : index
    %4 = vector.load %arg3[%c0_2, %c0_3] : memref<1x128xf32, #tpu.memory_space<vmem>>, vector<1x128xf32>
    %5 = vector.broadcast %4 : vector<1x128xf32> to vector<8x128xf32>
    %6 = arith.mulf %3, %5 : vector<8x128xf32>
    %c0_4 = arith.constant 0 : index
    %c0_5 = arith.constant 0 : index
    %7 = vector.load %arg4[%c0_4, %c0_5] : memref<1x128xf32, #tpu.memory_space<vmem>>, vector<1x128xf32>
    %8 = vector.broadcast %7 : vector<1x128xf32> to vector<8x128xf32>
    %9 = arith.addf %6, %8 : vector<8x128xf32>
    %10 = arith.mulf %9, %9 : vector<8x128xf32>
    %cst = arith.constant dense<0.000000e+00> : vector<8xf32>
    %11 = vector.multi_reduction <add>, %10, %cst [1] : vector<8x128xf32> to vector<8xf32>
    %12 = vector.shape_cast %11 : vector<8xf32> to vector<8x1xf32>
    %cst_6 = arith.constant 5.000000e-01 : f32
    %13 = vector.broadcast %cst_6 : f32 to vector<8x1xf32>
    %14 = arith.mulf %13, %12 : vector<8x1xf32>
    %15 = arith.truncf %9 : vector<8x128xf32> to vector<8x128xbf16>
    %c0_7 = arith.constant 0 : index
    %c0_8 = arith.constant 0 : index
    %16 = vector.load %arg6[%c0_7, %c0_8] : memref<128x128xbf16, #tpu.memory_space<vmem>>, vector<128x128xbf16>
    %cst_9 = arith.constant dense<0.000000e+00> : vector<8x128xf32>
    %17 = tpu.matmul %15, %16, %cst_9 {dimension_numbers = #tpu.dot_dimension_numbers<[1], [0], [0], [1], [0, 0, 1, 1], [], []>} : vector<8x128xbf16>, vector<128x128xbf16>, vector<8x128xf32> -> vector<8x128xf32>
    %18 = vector.broadcast %14 : vector<8x1xf32> to vector<8x128xf32>
    %19 = arith.subf %17, %18 : vector<8x128xf32>
    %c0_10 = arith.constant 0 : index
    %c0_11 = arith.constant 0 : index
    %20 = vector.load %arg5[%c0_10, %c0_11] : memref<1x128xf32, #tpu.memory_space<vmem>>, vector<1x128xf32>
    %21 = vector.broadcast %20 : vector<1x128xf32> to vector<8x128xf32>
    %22 = arith.subf %19, %21 : vector<8x128xf32>
    %23 = arith.mulf %22, %22 : vector<8x128xf32>
    %cst_12 = arith.constant -4.000000e+00 : f32
    %24 = vector.broadcast %cst_12 : f32 to vector<8x128xf32>
    %25 = arith.mulf %24, %23 : vector<8x128xf32>
    %26 = math.exp %25 : vector<8x128xf32>
    %c0_13 = arith.constant 0 : index
    %c0_14 = arith.constant 0 : index
    %27 = vector.load %arg10[%c0_13, %c0_14] : memref<8x128xf32, #tpu.memory_space<vmem>>, vector<8x128xf32>
    %28 = arith.truncf %26 : vector<8x128xf32> to vector<8x128xbf16>
    %c0_15 = arith.constant 0 : index
    %c0_16 = arith.constant 0 : index
    %29 = vector.load %arg7[%c0_15, %c0_16] : memref<128x128xbf16, #tpu.memory_space<vmem>>, vector<128x128xbf16>
    %cst_17 = arith.constant dense<0.000000e+00> : vector<8x128xf32>
    %30 = tpu.matmul %28, %29, %cst_17 {dimension_numbers = #tpu.dot_dimension_numbers<[1], [0], [0], [1], [0, 0, 1, 1], [], []>} : vector<8x128xbf16>, vector<128x128xbf16>, vector<8x128xf32> -> vector<8x128xf32>
    %31 = arith.addf %27, %30 : vector<8x128xf32>
    %c0_18 = arith.constant 0 : index
    %c0_19 = arith.constant 0 : index
    %32 = vector.load %arg10[%c0_18, %c0_19] : memref<8x128xf32, #tpu.memory_space<vmem>>, vector<8x128xf32>
    tpu.vector_store %arg10[%c0_18, %c0_19], %31 {strides = array<i32>} : memref<8x128xf32, #tpu.memory_space<vmem>>, vector<8x128xf32>,
    %c0_i32_20 = arith.constant 0 : i32
    %33 = arith.cmpi eq, %arg1, %c0_i32_20 : i32
    %34 = arith.extui %33 : i1 to i32
    %c0_i32_21 = arith.constant 0 : i32
    %35 = arith.cmpi ne, %34, %c0_i32_21 : i32
    scf.if %35 {
      %c0_22 = arith.constant 0 : index
      %c0_23 = arith.constant 0 : index
      %36 = vector.load %arg10[%c0_22, %c0_23] : memref<8x128xf32, #tpu.memory_space<vmem>>, vector<8x128xf32>
      %c0_24 = arith.constant 0 : index
      %c0_25 = arith.constant 0 : index
      %37 = vector.load %arg8[%c0_24, %c0_25] : memref<1x128xf32, #tpu.memory_space<vmem>>, vector<1x128xf32>
      %38 = vector.broadcast %37 : vector<1x128xf32> to vector<8x128xf32>
      %39 = arith.addf %36, %38 : vector<8x128xf32>
      %c0_26 = arith.constant 0 : index
      %c0_27 = arith.constant 0 : index
      %40 = vector.load %arg9[%c0_26, %c0_27] : memref<8x128xf32, #tpu.memory_space<vmem>>, vector<8x128xf32>
      tpu.vector_store %arg9[%c0_26, %c0_27], %39 {strides = array<i32>} : memref<8x128xf32, #tpu.memory_space<vmem>>, vector<8x128xf32>,
    } else {
    }
    return
  }
  func.func @transform_0(%arg0: i32, %arg1: i32) -> (i32, i32) {
    %c0_i32 = arith.constant 0 : i32
    %c0_i32_0 = arith.constant 0 : i32
    return %arg0, %c0_i32 : i32, i32
  }
  func.func @transform_1(%arg0: i32, %arg1: i32) -> (i32, i32) {
    %c0_i32 = arith.constant 0 : i32
    %c0_i32_0 = arith.constant 0 : i32
    %c0_i32_1 = arith.constant 0 : i32
    return %c0_i32, %c0_i32_0 : i32, i32
  }
  func.func @transform_2(%arg0: i32, %arg1: i32) -> (i32, i32) {
    %c0_i32 = arith.constant 0 : i32
    %c0_i32_0 = arith.constant 0 : i32
    %c0_i32_1 = arith.constant 0 : i32
    return %c0_i32, %c0_i32_0 : i32, i32
  }
  func.func @transform_3(%arg0: i32, %arg1: i32) -> (i32, i32) {
    %c0_i32 = arith.constant 0 : i32
    %c0_i32_0 = arith.constant 0 : i32
    return %c0_i32, %arg1 : i32, i32
  }
  func.func @transform_4(%arg0: i32, %arg1: i32) -> (i32, i32) {
    %c0_i32 = arith.constant 0 : i32
    %c0_i32_0 = arith.constant 0 : i32
    return %c0_i32, %arg1 : i32, i32
  }
  func.func @transform_5(%arg0: i32, %arg1: i32) -> (i32, i32) {
    %c0_i32 = arith.constant 0 : i32
    %c0_i32_0 = arith.constant 0 : i32
    return %arg1, %c0_i32 : i32, i32
  }
  func.func @transform_6(%arg0: i32, %arg1: i32) -> (i32, i32) {
    %c0_i32 = arith.constant 0 : i32
    %c0_i32_0 = arith.constant 0 : i32
    %c0_i32_1 = arith.constant 0 : i32
    return %c0_i32, %c0_i32_0 : i32, i32
  }
  func.func @transform_7(%arg0: i32, %arg1: i32) -> (i32, i32) {
    %c0_i32 = arith.constant 0 : i32
    %c0_i32_0 = arith.constant 0 : i32
    return %arg0, %c0_i32 : i32, i32
  }
}

</mosaic_0001>

<llo_original>
// kernel: tpu_custom_call.1
$region0: #{tpu_custom_call.1}
  #allocation0 [shape = 'u32[]', space=smem, size = 0x4, offset = 0x4, fixed_abs, tag = 'smem constant byte address 0x4 - core index']
  #allocation1 [shape = 'u32[144,128]{1,0:T(1,128)}', space=vmem, size = 0x12000, scoped, tag = 'internal scratch']
  #allocation2 [shape = 'f32[8,128]{1,0:T(8,128)}', space=vmem, size = 0x1000, scoped, tag = 'scratch operand']
  %s0 = inlined_call_operand.hbm [shape: f32[8,128], index: 0, kind: input, shape index: {}]
  %s1 = inlined_call_operand.vmem [shape: f32[1,128], index: 1, kind: input, shape index: {}]
  %s2 = inlined_call_operand.vmem [shape: f32[1,128], index: 2, kind: input, shape index: {}]
  %s3 = inlined_call_operand.vmem [shape: f32[1,128], index: 3, kind: input, shape index: {}]
  %s4 = inlined_call_operand.hbm [shape: bf16[128,128], index: 4, kind: input, shape index: {}]
  %s5 = inlined_call_operand.hbm [shape: bf16[128,128], index: 5, kind: input, shape index: {}]
  %s6 = inlined_call_operand.vmem [shape: f32[1,128], index: 6, kind: input, shape index: {}]
  %s7 = inlined_call_operand.hbm [shape: f32[8,128], index: 7, kind: output, shape index: {}]
  %s8 = sld [smem:[#allocation0]]
  $region58: #{tpu_custom_call.1} parent=0
    _
  %s10 = ssub.s32 1, %s8
  %s11 = scalar_select 0, %s10, %s8
  $region1: #{tpu_custom_call.1} parent=0
    #allocation3 [shape = 'u8[4096]{0}', space=vmem, size = 0x1000, scoped, tag = 'input window, operand 0, single buffered']
    #allocation4 [shape = 's32[1]{0}', space=sflag, size = 0x4, scoped, tag = 'scoped memory for tpu_custom_call.1']
    #allocation5 [shape = 's32[1]{0}', space=sflag, size = 0x4, scoped, tag = 'scoped memory for tpu_custom_call.1']
    #allocation6 [shape = 'u8[32768]{0}', space=vmem, size = 0x8000, scoped, tag = 'input window, operand 4, single buffered']
    #allocation7 [shape = 's32[1]{0}', space=sflag, size = 0x4, scoped, tag = 'scoped memory for tpu_custom_call.1']
    #allocation8 [shape = 'u8[32768]{0}', space=vmem, size = 0x8000, scoped, tag = 'input window, operand 5, single buffered']
    #allocation9 [shape = 'u8[4096]{0}', space=vmem, size = 0x1000, scoped, tag = 'output window, operand 0, single buffered']
    %12 = vsyncpa [#allocation4], 0
    %13 = vsyncpa [#allocation7], 0
    %14 = vsyncpa [#allocation5], 0
    // Predicated region
    $region2: #{tpu_custom_call.1} parent=1 // pred_check
      _
    $region3: #{tpu_custom_call.1} parent=1 // pred_check_branch
      %16 = sbr.rel (0) target = $region5
    $region4: #{tpu_custom_call.1} parent=1 // pred_region
      %s18 = ssub.s32 128, 128
      %19 = vsyncadd [#allocation4], %s18
      %s21 = sshll.u32 [#allocation3], 4
      %s22 = int_to_ptr.vmem [resolvable:$true] %s21
      %24 = dma.hbm_to_vmem [thread:$0]  %s0, 128, %s22, [#allocation4]
    $region5: #{tpu_custom_call.1} parent=1 // pred_fallthru
      _
    // Predicated region
    $region6: #{tpu_custom_call.1} parent=1 // pred_check
      _
    $region7: #{tpu_custom_call.1} parent=1 // pred_check_branch
      %26 = sbr.rel (0) target = $region9
    $region8: #{tpu_custom_call.1} parent=1 // pred_region
      _
    $region9: #{tpu_custom_call.1} parent=1 // pred_fallthru
      _
    // Predicated region
    $region10: #{tpu_custom_call.1} parent=1 // pred_check
      _
    $region11: #{tpu_custom_call.1} parent=1 // pred_check_branch
      %28 = sbr.rel (0) target = $region13
    $region12: #{tpu_custom_call.1} parent=1 // pred_region
      _
    $region13: #{tpu_custom_call.1} parent=1 // pred_fallthru
      _
    // Predicated region
    $region14: #{tpu_custom_call.1} parent=1 // pred_check
      _
    $region15: #{tpu_custom_call.1} parent=1 // pred_check_branch
      %30 = sbr.rel (0) target = $region17
    $region16: #{tpu_custom_call.1} parent=1 // pred_region
      _
    $region17: #{tpu_custom_call.1} parent=1 // pred_fallthru
      _
    // Predicated region
    $region18: #{tpu_custom_call.1} parent=1 // pred_check
      _
    $region19: #{tpu_custom_call.1} parent=1 // pred_check_branch
      %32 = sbr.rel (0) target = $region21
    $region20: #{tpu_custom_call.1} parent=1 // pred_region
      %s34 = ssub.s32 1024, 1024
      %35 = vsyncadd [#allocation7], %s34
      %s36 = sshll.u32 [#allocation6], 4
      %s37 = int_to_ptr.vmem [resolvable:$true] %s36
      %42 = dma.hbm_to_vmem [thread:$0]  %s4, 1024, %s37, [#allocation7], 64, 64, 4
    $region21: #{tpu_custom_call.1} parent=1 // pred_fallthru
      _
    // Predicated region
    $region22: #{tpu_custom_call.1} parent=1 // pred_check
      _
    $region23: #{tpu_custom_call.1} parent=1 // pred_check_branch
      %44 = sbr.rel (0) target = $region25
    $region24: #{tpu_custom_call.1} parent=1 // pred_region
      %s46 = ssub.s32 1024, 1024
      %47 = vsyncadd [#allocation7], %s46
      %s48 = sshll.u32 [#allocation8], 4
      %s49 = int_to_ptr.vmem [resolvable:$true] %s48
      %54 = dma.hbm_to_vmem [thread:$0]  %s5, 1024, %s49, [#allocation7], 64, 64, 4
    $region25: #{tpu_custom_call.1} parent=1 // pred_fallthru
      _
    // Predicated region
    $region26: #{tpu_custom_call.1} parent=1 // pred_check
      _
    $region27: #{tpu_custom_call.1} parent=1 // pred_check_branch
      %56 = sbr.rel (0) target = $region29
    $region28: #{tpu_custom_call.1} parent=1 // pred_region
      _
    $region29: #{tpu_custom_call.1} parent=1 // pred_fallthru
      _
    // Predicated region
    $region30: #{tpu_custom_call.1} parent=1 // pred_check
      _
    $region31: #{tpu_custom_call.1} parent=1 // pred_check_branch
      %58 = sbr.rel (0) target = $region33
    $region32: #{tpu_custom_call.1} parent=1 // pred_region
      %59 = dma.done [#allocation4], 128
    $region33: #{tpu_custom_call.1} parent=1 // pred_fallthru
      _
    // Predicated region
    $region34: #{tpu_custom_call.1} parent=1 // pred_check
      _
    $region35: #{tpu_custom_call.1} parent=1 // pred_check_branch
      %61 = sbr.rel (0) target = $region37
    $region36: #{tpu_custom_call.1} parent=1 // pred_region
      %62 = dma.done [#allocation7], 1024
    $region37: #{tpu_custom_call.1} parent=1 // pred_fallthru
      _
    // Predicated region
    $region38: #{tpu_custom_call.1} parent=1 // pred_check
      _
    $region39: #{tpu_custom_call.1} parent=1 // pred_check_branch
      %64 = sbr.rel (0) target = $region41
    $region40: #{tpu_custom_call.1} parent=1 // pred_region
      %65 = dma.done [#allocation7], 1024
    $region41: #{tpu_custom_call.1} parent=1 // pred_fallthru
      _
    %p67 = scmp.eq.s32.totalorder 0, 0
    // Predicated region
    $region42: #{tpu_custom_call.1} parent=1 // pred_check
      %p68 = pneg %p67
    $region43: #{tpu_custom_call.1} parent=1 // pred_check_branch
      %70 = sbr.rel (%p68) target = $region45
    $region44: #{tpu_custom_call.1} parent=1 // pred_region
      %71 = vst [vmem:[#allocation2] sm:$0xff] 0.0
    $region45: #{tpu_custom_call.1} parent=1 // pred_fallthru
      _
    %v72 = vld [vmem:[#allocation3] sm:$0xff]
    %v73 = vld [vmem:[%s1] sm:$0x1]
    %v75 = vlaneseq
    %v76 = vshrl.u32 %v75, 7
    %v77 = vsub.s32 0, %v76
    %v78 = vrot.slane %v73, %v77
    %v80 = vmul.f32 %v72, %v78
    %v81 = vld [vmem:[%s2] sm:$0x1]
    %v83 = vlaneseq
    %v84 = vshrl.u32 %v83, 7
    %v85 = vsub.s32 0, %v84
    %v86 = vrot.slane %v81, %v85
    %v88 = vadd.f32 %v80, %v86
    %v89 = vmul.f32 %v88, %v88
    %90 = vadd.xlane.f32.xlu0 %v89
    %v91 = vpop.xlane.xlu0 %90
    %v92 = vmul.f32 %v91, 0.5
    %v93 = vpack.c.bf16 %v88, %v88
    %v94 = vld [vmem:[#allocation6] sm:$0xf]
    %v95 = vld [vmem:[#allocation6 + $0x4] sm:$0xf]
    %v96 = vld [vmem:[#allocation6 + $0x8] sm:$0xf]
    %v97 = vld [vmem:[#allocation6 + $0xc] sm:$0xf]
    %v98 = vld [vmem:[#allocation6 + $0x10] sm:$0xf]
    %v99 = vld [vmem:[#allocation6 + $0x14] sm:$0xf]
    %v100 = vld [vmem:[#allocation6 + $0x18] sm:$0xf]
    %v101 = vld [vmem:[#allocation6 + $0x1c] sm:$0xf]
    %v102 = vld [vmem:[#allocation6 + $0x20] sm:$0xf]
    %v103 = vld [vmem:[#allocation6 + $0x24] sm:$0xf]
    %v104 = vld [vmem:[#allocation6 + $0x28] sm:$0xf]
    %v105 = vld [vmem:[#allocation6 + $0x2c] sm:$0xf]
    %v106 = vld [vmem:[#allocation6 + $0x30] sm:$0xf]
    %v107 = vld [vmem:[#allocation6 + $0x34] sm:$0xf]
    %v108 = vld [vmem:[#allocation6 + $0x38] sm:$0xf]
    %v109 = vld [vmem:[#allocation6 + $0x3c] sm:$0xf]
    %v126 = vunpack.c.l.b16 %v94
    %v127 = vunpack.c.l.b16 %v95
    %v128 = vunpack.c.l.b16 %v96
    %v129 = vunpack.c.l.b16 %v97
    %v130 = vunpack.c.l.b16 %v98
    %v131 = vunpack.c.l.b16 %v99
    %v132 = vunpack.c.l.b16 %v100
    %v133 = vunpack.c.l.b16 %v101
    %v134 = vunpack.c.l.b16 %v102
    %v135 = vunpack.c.l.b16 %v103
    %v136 = vunpack.c.l.b16 %v104
    %v137 = vunpack.c.l.b16 %v105
    %v138 = vunpack.c.l.b16 %v106
    %v139 = vunpack.c.l.b16 %v107
    %v140 = vunpack.c.l.b16 %v108
    %v141 = vunpack.c.l.b16 %v109
    %v142 = vpack.c.b16 %v127, %v126
    %v143 = vpack.c.b16 %v129, %v128
    %v144 = vpack.c.b16 %v131, %v130
    %v145 = vpack.c.b16 %v133, %v132
    %v146 = vpack.c.b16 %v135, %v134
    %v147 = vpack.c.b16 %v137, %v136
    %v148 = vpack.c.b16 %v139, %v138
    %v149 = vpack.c.b16 %v141, %v140
    %158 = vmatprep.subr.bf16.mxu0 0
    %159 = vmatpush1.bf16.msra.mxu0 %v149
    %160 = vmatprep.subr.bf16.mxu0 0
    %161 = vmatpush1.bf16.msra.mxu0 %v148
    %162 = vmatprep.subr.bf16.mxu0 0
    %163 = vmatpush1.bf16.msra.mxu0 %v147
    %164 = vmatprep.subr.bf16.mxu0 0
    %165 = vmatpush1.bf16.msra.mxu0 %v146
    %166 = vmatprep.subr.bf16.mxu0 0
    %167 = vmatpush1.bf16.msra.mxu0 %v145
    %168 = vmatprep.subr.bf16.mxu0 0
    %169 = vmatpush1.bf16.msra.mxu0 %v144
    %170 = vmatprep.subr.bf16.mxu0 0
    %171 = vmatpush1.bf16.msra.mxu0 %v143
    %172 = vmatprep.subr.bf16.mxu0 0
    %173 = vmatpush1.bf16.msra.mxu0 %v142
    %174 = vmatprep.subr.bf16.mxu0 0
    %175 = vmatpush2.bf16.msra.mxu0 0
    %176 = vmatprep.subr.bf16.mxu0 0
    %177 = vmatpush2.bf16.msra.mxu0 0
    %178 = vmatprep.subr.bf16.mxu0 0
    %179 = vmatpush2.bf16.msra.mxu0 0
    %180 = vmatprep.subr.bf16.mxu0 0
    %181 = vmatpush2.bf16.msra.mxu0 0
    %182 = vmatprep.subr.bf16.mxu0 0
    %183 = vmatpush2.bf16.msra.mxu0 0
    %184 = vmatprep.subr.bf16.mxu0 0
    %185 = vmatpush2.bf16.msra.mxu0 0
    %186 = vmatprep.subr.bf16.mxu0 0
    %187 = vmatpush2.bf16.msra.mxu0 0
    %188 = vmatprep.subr.bf16.mxu0 0
    %189 = vmatpush2.bf16.msra.mxu0 0
    %190 = vmatprep.mubr.bf16.mxu0 0
    %191 = vmatmul.mubr.bf16.gmra.mxu0 %v93
    %v192 = vpop.f32.mrf.mxu0
    %v193 = vadd.f32 0.0, %v192
    %v194 = vpop.f32.mrf.mxu0
    %v195 = vpop.f32.mrf.mxu0
    %v196 = vpop.f32.mrf.mxu0
    %197 = vdwg.mxu0
    %v198 = vsub.f32 %v193, %v92
    %v199 = vld [vmem:[%s3] sm:$0x1]
    %v201 = vlaneseq
    %v202 = vshrl.u32 %v201, 7
    %v203 = vsub.s32 0, %v202
    %v204 = vrot.slane %v199, %v203
    %v206 = vsub.f32 %v198, %v204
    %v207 = vmul.f32 %v206, %v206
    %v208 = vmul.f32 %v207, -4.0
    %v209 = vmul.f32 %v208, 1.442695
    %v210 = vpow.pop %v209
    %v211 = vld [vmem:[#allocation2] sm:$0xff]
    %v212 = vpack.c.bf16 %v210, %v210
    %v213 = vld [vmem:[#allocation8] sm:$0xf]
    %v214 = vld [vmem:[#allocation8 + $0x4] sm:$0xf]
    %v215 = vld [vmem:[#allocation8 + $0x8] sm:$0xf]
    %v216 = vld [vmem:[#allocation8 + $0xc] sm:$0xf]
    %v217 = vld [vmem:[#allocation8 + $0x10] sm:$0xf]
    %v218 = vld [vmem:[#allocation8 + $0x14] sm:$0xf]
    %v219 = vld [vmem:[#allocation8 + $0x18] sm:$0xf]
    %v220 = vld [vmem:[#allocation8 + $0x1c] sm:$0xf]
    %v221 = vld [vmem:[#allocation8 + $0x20] sm:$0xf]
    %v222 = vld [vmem:[#allocation8 + $0x24] sm:$0xf]
    %v223 = vld [vmem:[#allocation8 + $0x28] sm:$0xf]
    %v224 = vld [vmem:[#allocation8 + $0x2c] sm:$0xf]
    %v225 = vld [vmem:[#allocation8 + $0x30] sm:$0xf]
    %v226 = vld [vmem:[#allocation8 + $0x34] sm:$0xf]
    %v227 = vld [vmem:[#allocation8 + $0x38] sm:$0xf]
    %v228 = vld [vmem:[#allocation8 + $0x3c] sm:$0xf]
    %v245 = vunpack.c.l.b16 %v213
    %v246 = vunpack.c.l.b16 %v214
    %v247 = vunpack.c.l.b16 %v215
    %v248 = vunpack.c.l.b16 %v216
    %v249 = vunpack.c.l.b16 %v217
    %v250 = vunpack.c.l.b16 %v218
    %v251 = vunpack.c.l.b16 %v219
    %v252 = vunpack.c.l.b16 %v220
    %v253 = vunpack.c.l.b16 %v221
    %v254 = vunpack.c.l.b16 %v222
    %v255 = vunpack.c.l.b16 %v223
    %v256 = vunpack.c.l.b16 %v224
    %v257 = vunpack.c.l.b16 %v225
    %v258 = vunpack.c.l.b16 %v226
    %v259 = vunpack.c.l.b16 %v227
    %v260 = vunpack.c.l.b16 %v228
    %v261 = vpack.c.b16 %v246, %v245
    %v262 = vpack.c.b16 %v248, %v247
    %v263 = vpack.c.b16 %v250, %v249
    %v264 = vpack.c.b16 %v252, %v251
    %v265 = vpack.c.b16 %v254, %v253
    %v266 = vpack.c.b16 %v256, %v255
    %v267 = vpack.c.b16 %v258, %v257
    %v268 = vpack.c.b16 %v260, %v259
    %277 = vmatprep.subr.bf16.mxu0 0
    %278 = vmatpush1.bf16.msra.mxu0 %v268
    %279 = vmatprep.subr.bf16.mxu0 0
    %280 = vmatpush1.bf16.msra.mxu0 %v267
    %281 = vmatprep.subr.bf16.mxu0 0
    %282 = vmatpush1.bf16.msra.mxu0 %v266
    %283 = vmatprep.subr.bf16.mxu0 0
    %284 = vmatpush1.bf16.msra.mxu0 %v265
    %285 = vmatprep.subr.bf16.mxu0 0
    %286 = vmatpush1.bf16.msra.mxu0 %v264
    %287 = vmatprep.subr.bf16.mxu0 0
    %288 = vmatpush1.bf16.msra.mxu0 %v263
    %289 = vmatprep.subr.bf16.mxu0 0
    %290 = vmatpush1.bf16.msra.mxu0 %v262
    %291 = vmatprep.subr.bf16.mxu0 0
    %292 = vmatpush1.bf16.msra.mxu0 %v261
    %293 = vmatprep.subr.bf16.mxu0 0
    %294 = vmatpush2.bf16.msra.mxu0 0
    %295 = vmatprep.subr.bf16.mxu0 0
    %296 = vmatpush2.bf16.msra.mxu0 0
    %297 = vmatprep.subr.bf16.mxu0 0
    %298 = vmatpush2.bf16.msra.mxu0 0
    %299 = vmatprep.subr.bf16.mxu0 0
    %300 = vmatpush2.bf16.msra.mxu0 0
    %301 = vmatprep.subr.bf16.mxu0 0
    %302 = vmatpush2.bf16.msra.mxu0 0
    %303 = vmatprep.subr.bf16.mxu0 0
    %304 = vmatpush2.bf16.msra.mxu0 0
    %305 = vmatprep.subr.bf16.mxu0 0
    %306 = vmatpush2.bf16.msra.mxu0 0
    %307 = vmatprep.subr.bf16.mxu0 0
    %308 = vmatpush2.bf16.msra.mxu0 0
    %309 = vmatprep.mubr.bf16.mxu0 0
    %310 = vmatmul.mubr.bf16.gmra.mxu0 %v212
    %v311 = vpop.f32.mrf.mxu0
    %v312 = vadd.f32 0.0, %v311
    %v313 = vpop.f32.mrf.mxu0
    %v314 = vpop.f32.mrf.mxu0
    %v315 = vpop.f32.mrf.mxu0
    %316 = vdwg.mxu0
    %v317 = vadd.f32 %v211, %v312
    %318 = vst [vmem:[#allocation2] sm:$0xff] %v317
    // Predicated region
    $region46: #{tpu_custom_call.1} parent=1 // pred_check
      %p319 = pneg %p67
    $region47: #{tpu_custom_call.1} parent=1 // pred_check_branch
      %321 = sbr.rel (%p319) target = $region49
    $region48: #{tpu_custom_call.1} parent=1 // pred_region
      %v322 = vld [vmem:[#allocation2] sm:$0xff]
      %v323 = vld [vmem:[%s6] sm:$0x1]
      %v325 = vlaneseq
      %v326 = vshrl.u32 %v325, 7
      %v327 = vsub.s32 0, %v326
      %v328 = vrot.slane %v323, %v327
      %v330 = vadd.f32 %v322, %v328
      %331 = vst [vmem:[#allocation9] sm:$0xff] %v330
    $region49: #{tpu_custom_call.1} parent=1 // pred_fallthru
      _
    // Predicated region
    $region50: #{tpu_custom_call.1} parent=1 // pred_check
      _
    $region51: #{tpu_custom_call.1} parent=1 // pred_check_branch
      %333 = sbr.rel (0) target = $region53
    $region52: #{tpu_custom_call.1} parent=1 // pred_region
      %s335 = ssub.s32 128, 128
      %336 = vsyncadd [#allocation5], %s335
      %s338 = sshll.u32 [#allocation9], 4
      %s339 = int_to_ptr.vmem [resolvable:$true] %s338
      %341 = dma.vmem_to_hbm [thread:$0]  %s339, 128, %s7, [#allocation5]
    $region53: #{tpu_custom_call.1} parent=1 // pred_fallthru
      _
    // Predicated region
    $region54: #{tpu_custom_call.1} parent=1 // pred_check
      _
    $region55: #{tpu_custom_call.1} parent=1 // pred_check_branch
      %343 = sbr.rel (0) target = $region57
    $region56: #{tpu_custom_call.1} parent=1 // pred_region
      %344 = dma.done [#allocation5], 128
    $region57: #{tpu_custom_call.1} parent=1 // pred_fallthru
      _
    %345 = vsyncpa [#allocation4], 1
    %346 = vsyncpa [#allocation7], 1
    %347 = vsyncpa [#allocation5], 1

// kernel: tpu_custom_call.1
$region0: #{tpu_custom_call.1}
  #allocation0 [shape = 'u32[]', space=smem, size = 0x4, offset = 0x4, fixed_abs, tag = 'smem constant byte address 0x4 - core index']
  #allocation1 [shape = 'u32[144,128]{1,0:T(1,128)}', space=vmem, size = 0x12000, scoped, tag = 'internal scratch']
  #allocation2 [shape = 'f32[8,128]{1,0:T(8,128)}', space=vmem, size = 0x1000, scoped, tag = 'scratch operand']
  %s0 = inlined_call_operand.hbm [shape: f32[8,128], index: 0, kind: input, shape index: {}]
  %s1 = inlined_call_operand.vmem [shape: f32[1,128], index: 1, kind: input, shape index: {}]
  %s2 = inlined_call_operand.vmem [shape: f32[1,128], index: 2, kind: input, shape index: {}]
  %s3 = inlined_call_operand.vmem [shape: f32[1,128], index: 3, kind: input, shape index: {}]
  %s4 = inlined_call_operand.hbm [shape: bf16[128,128], index: 4, kind: input, shape index: {}]
  %s5 = inlined_call_operand.hbm [shape: bf16[128,128], index: 5, kind: input, shape index: {}]
  %s6 = inlined_call_operand.vmem [shape: f32[1,128], index: 6, kind: input, shape index: {}]
  %s7 = inlined_call_operand.hbm [shape: f32[8,128], index: 7, kind: output, shape index: {}]
  %s8 = sld [smem:[#allocation0]]
  $region58: #{tpu_custom_call.1} parent=0
    _
  %s10 = ssub.s32 1, %s8
  %s11 = scalar_select 0, %s10, %s8
  $region1: #{tpu_custom_call.1} parent=0
    #allocation3 [shape = 'u8[4096]{0}', space=vmem, size = 0x1000, scoped, tag = 'input window, operand 0, single buffered']
    #allocation4 [shape = 's32[1]{0}', space=sflag, size = 0x4, scoped, tag = 'scoped memory for tpu_custom_call.1']
    #allocation5 [shape = 's32[1]{0}', space=sflag, size = 0x4, scoped, tag = 'scoped memory for tpu_custom_call.1']
    #allocation6 [shape = 'u8[32768]{0}', space=vmem, size = 0x8000, scoped, tag = 'input window, operand 4, single buffered']
    #allocation7 [shape = 's32[1]{0}', space=sflag, size = 0x4, scoped, tag = 'scoped memory for tpu_custom_call.1']
    #allocation8 [shape = 'u8[32768]{0}', space=vmem, size = 0x8000, scoped, tag = 'input window, operand 5, single buffered']
    #allocation9 [shape = 'u8[4096]{0}', space=vmem, size = 0x1000, scoped, tag = 'output window, operand 0, single buffered']
    %12 = vsyncpa [#allocation4], 0
    %13 = vsyncpa [#allocation7], 0
    %14 = vsyncpa [#allocation5], 0
    // Predicated region
    $region2: #{tpu_custom_call.1} parent=1 // pred_check
      _
    $region3: #{tpu_custom_call.1} parent=1 // pred_check_branch
      %16 = sbr.rel (0) target = $region5
    $region4: #{tpu_custom_call.1} parent=1 // pred_region
      %s18 = ssub.s32 128, 128
      %19 = vsyncadd [#allocation4], %s18
      %s21 = sshll.u32 [#allocation3], 4
      %s22 = int_to_ptr.vmem [resolvable:$true] %s21
      %24 = dma.hbm_to_vmem [thread:$0]  %s0, 128, %s22, [#allocation4]
    $region5: #{tpu_custom_call.1} parent=1 // pred_fallthru
      _
    // Predicated region
    $region6: #{tpu_custom_call.1} parent=1 // pred_check
      _
    $region7: #{tpu_custom_call.1} parent=1 // pred_check_branch
      %26 = sbr.rel (0) target = $region9
    $region8: #{tpu_custom_call.1} parent=1 // pred_region
      _
    $region9: #{tpu_custom_call.1} parent=1 // pred_fallthru
      _
    // Predicated region
    $region10: #{tpu_custom_call.1} parent=1 // pred_check
      _
    $region11: #{tpu_custom_call.1} parent=1 // pred_check_branch
      %28 = sbr.rel (0) target = $region13
    $region12: #{tpu_custom_call.1} parent=1 // pred_region
      _
    $region13: #{tpu_custom_call.1} parent=1 // pred_fallthru
      _
    // Predicated region
    $region14: #{tpu_custom_call.1} parent=1 // pred_check
      _
    $region15: #{tpu_custom_call.1} parent=1 // pred_check_branch
      %30 = sbr.rel (0) target = $region17
    $region16: #{tpu_custom_call.1} parent=1 // pred_region
      _
    $region17: #{tpu_custom_call.1} parent=1 // pred_fallthru
      _
    // Predicated region
    $region18: #{tpu_custom_call.1} parent=1 // pred_check
      _
    $region19: #{tpu_custom_call.1} parent=1 // pred_check_branch
      %32 = sbr.rel (0) target = $region21
    $region20: #{tpu_custom_call.1} parent=1 // pred_region
      %s34 = ssub.s32 1024, 1024
      %35 = vsyncadd [#allocation7], %s34
      %s36 = sshll.u32 [#allocation6], 4
      %s37 = int_to_ptr.vmem [resolvable:$true] %s36
      %42 = dma.hbm_to_vmem [thread:$0]  %s4, 1024, %s37, [#allocation7], 64, 64, 4
    $region21: #{tpu_custom_call.1} parent=1 // pred_fallthru
      _
    // Predicated region
    $region22: #{tpu_custom_call.1} parent=1 // pred_check
      _
    $region23: #{tpu_custom_call.1} parent=1 // pred_check_branch
      %44 = sbr.rel (0) target = $region25
    $region24: #{tpu_custom_call.1} parent=1 // pred_region
      %s46 = ssub.s32 1024, 1024
      %47 = vsyncadd [#allocation7], %s46
      %s48 = sshll.u32 [#allocation8], 4
      %s49 = int_to_ptr.vmem [resolvable:$true] %s48
      %54 = dma.hbm_to_vmem [thread:$0]  %s5, 1024, %s49, [#allocation7], 64, 64, 4
    $region25: #{tpu_custom_call.1} parent=1 // pred_fallthru
      _
    // Predicated region
    $region26: #{tpu_custom_call.1} parent=1 // pred_check
      _
    $region27: #{tpu_custom_call.1} parent=1 // pred_check_branch
      %56 = sbr.rel (0) target = $region29
    $region28: #{tpu_custom_call.1} parent=1 // pred_region
      _
    $region29: #{tpu_custom_call.1} parent=1 // pred_fallthru
      _
    // Predicated region
    $region30: #{tpu_custom_call.1} parent=1 // pred_check
      _
    $region31: #{tpu_custom_call.1} parent=1 // pred_check_branch
      %58 = sbr.rel (0) target = $region33
    $region32: #{tpu_custom_call.1} parent=1 // pred_region
      %59 = dma.done [#allocation4], 128
    $region33: #{tpu_custom_call.1} parent=1 // pred_fallthru
      _
    // Predicated region
    $region34: #{tpu_custom_call.1} parent=1 // pred_check
      _
    $region35: #{tpu_custom_call.1} parent=1 // pred_check_branch
      %61 = sbr.rel (0) target = $region37
    $region36: #{tpu_custom_call.1} parent=1 // pred_region
      %62 = dma.done [#allocation7], 1024
    $region37: #{tpu_custom_call.1} parent=1 // pred_fallthru
      _
    // Predicated region
    $region38: #{tpu_custom_call.1} parent=1 // pred_check
      _
    $region39: #{tpu_custom_call.1} parent=1 // pred_check_branch
      %64 = sbr.rel (0) target = $region41
    $region40: #{tpu_custom_call.1} parent=1 // pred_region
      %65 = dma.done [#allocation7], 1024
    $region41: #{tpu_custom_call.1} parent=1 // pred_fallthru
      _
    %p67 = scmp.eq.s32.totalorder 0, 0
    // Predicated region
    $region42: #{tpu_custom_call.1} parent=1 // pred_check
      %p68 = pneg %p67
    $region43: #{tpu_custom_call.1} parent=1 // pred_check_branch
      %70 = sbr.rel (%p68) target = $region45
    $region44: #{tpu_custom_call.1} parent=1 // pred_region
      %71 = vst [vmem:[#allocation2] sm:$0xff] 0.0
    $region45: #{tpu_custom_call.1} parent=1 // pred_fallthru
      _
    %v72 = vld [vmem:[#allocation3] sm:$0xff]
    %v73 = vld [vmem:[%s1] sm:$0x1]
    %v75 = vlaneseq
    %v76 = vshrl.u32 %v75, 7
    %v77 = vsub.s32 0, %v76
    %v78 = vrot.slane %v73, %v77
    %v80 = vmul.f32 %v72, %v78
    %v81 = vld [vmem:[%s2] sm:$0x1]
    %v83 = vlaneseq
    %v84 = vshrl.u32 %v83, 7
    %v85 = vsub.s32 0, %v84
    %v86 = vrot.slane %v81, %v85
    %v88 = vadd.f32 %v80, %v86
    %v89 = vmul.f32 %v88, %v88
    %90 = vadd.xlane.f32.xlu0 %v89
    %v91 = vpop.xlane.xlu0 %90
    %v92 = vmul.f32 %v91, 0.5
    %v93 = vpack.c.bf16 %v88, %v88
    %v94 = vld [vmem:[#allocation6] sm:$0xf]
    %v95 = vld [vmem:[#allocation6 + $0x4] sm:$0xf]
    %v96 = vld [vmem:[#allocation6 + $0x8] sm:$0xf]
    %v97 = vld [vmem:[#allocation6 + $0xc] sm:$0xf]
    %v98 = vld [vmem:[#allocation6 + $0x10] sm:$0xf]
    %v99 = vld [vmem:[#allocation6 + $0x14] sm:$0xf]
    %v100 = vld [vmem:[#allocation6 + $0x18] sm:$0xf]
    %v101 = vld [vmem:[#allocation6 + $0x1c] sm:$0xf]
    %v102 = vld [vmem:[#allocation6 + $0x20] sm:$0xf]
    %v103 = vld [vmem:[#allocation6 + $0x24] sm:$0xf]
    %v104 = vld [vmem:[#allocation6 + $0x28] sm:$0xf]
    %v105 = vld [vmem:[#allocation6 + $0x2c] sm:$0xf]
    %v106 = vld [vmem:[#allocation6 + $0x30] sm:$0xf]
    %v107 = vld [vmem:[#allocation6 + $0x34] sm:$0xf]
    %v108 = vld [vmem:[#allocation6 + $0x38] sm:$0xf]
    %v109 = vld [vmem:[#allocation6 + $0x3c] sm:$0xf]
    %v126 = vunpack.c.l.b16 %v94
    %v127 = vunpack.c.l.b16 %v95
    %v128 = vunpack.c.l.b16 %v96
    %v129 = vunpack.c.l.b16 %v97
    %v130 = vunpack.c.l.b16 %v98
    %v131 = vunpack.c.l.b16 %v99
    %v132 = vunpack.c.l.b16 %v100
    %v133 = vunpack.c.l.b16 %v101
    %v134 = vunpack.c.l.b16 %v102
    %v135 = vunpack.c.l.b16 %v103
    %v136 = vunpack.c.l.b16 %v104
    %v137 = vunpack.c.l.b16 %v105
    %v138 = vunpack.c.l.b16 %v106
    %v139 = vunpack.c.l.b16 %v107
    %v140 = vunpack.c.l.b16 %v108
    %v141 = vunpack.c.l.b16 %v109
    %v142 = vpack.c.b16 %v127, %v126
    %v143 = vpack.c.b16 %v129, %v128
    %v144 = vpack.c.b16 %v131, %v130
    %v145 = vpack.c.b16 %v133, %v132
    %v146 = vpack.c.b16 %v135, %v134
    %v147 = vpack.c.b16 %v137, %v136
    %v148 = vpack.c.b16 %v139, %v138
    %v149 = vpack.c.b16 %v141, %v140
    %158 = vmatprep.subr.bf16.mxu0 0
    %159 = vmatpush1.bf16.msra.mxu0 %v149
    %160 = vmatprep.subr.bf16.mxu0 0
    %161 = vmatpush1.bf16.msra.mxu0 %v148
    %162 = vmatprep.subr.bf16.mxu0 0
    %163 = vmatpush1.bf16.msra.mxu0 %v147
    %164 = vmatprep.subr.bf16.mxu0 0
    %165 = vmatpush1.bf16.msra.mxu0 %v146
    %166 = vmatprep.subr.bf16.mxu0 0
    %167 = vmatpush1.bf16.msra.mxu0 %v145
    %168 = vmatprep.subr.bf16.mxu0 0
    %169 = vmatpush1.bf16.msra.mxu0 %v144
    %170 = vmatprep.subr.bf16.mxu0 0
    %171 = vmatpush1.bf16.msra.mxu0 %v143
    %172 = vmatprep.subr.bf16.mxu0 0
    %173 = vmatpush1.bf16.msra.mxu0 %v142
    %174 = vmatprep.subr.bf16.mxu0 0
    %175 = vmatpush2.bf16.msra.mxu0 0
    %176 = vmatprep.subr.bf16.mxu0 0
    %177 = vmatpush2.bf16.msra.mxu0 0
    %178 = vmatprep.subr.bf16.mxu0 0
    %179 = vmatpush2.bf16.msra.mxu0 0
    %180 = vmatprep.subr.bf16.mxu0 0
    %181 = vmatpush2.bf16.msra.mxu0 0
    %182 = vmatprep.subr.bf16.mxu0 0
    %183 = vmatpush2.bf16.msra.mxu0 0
    %184 = vmatprep.subr.bf16.mxu0 0
    %185 = vmatpush2.bf16.msra.mxu0 0
    %186 = vmatprep.subr.bf16.mxu0 0
    %187 = vmatpush2.bf16.msra.mxu0 0
    %188 = vmatprep.subr.bf16.mxu0 0
    %189 = vmatpush2.bf16.msra.mxu0 0
    %190 = vmatprep.mubr.bf16.mxu0 0
    %191 = vmatmul.mubr.bf16.gmra.mxu0 %v93
    %v192 = vpop.f32.mrf.mxu0
    %v193 = vadd.f32 0.0, %v192
    %v194 = vpop.f32.mrf.mxu0
    %v195 = vpop.f32.mrf.mxu0
    %v196 = vpop.f32.mrf.mxu0
    %197 = vdwg.mxu0
    %v198 = vsub.f32 %v193, %v92
    %v199 = vld [vmem:[%s3] sm:$0x1]
    %v201 = vlaneseq
    %v202 = vshrl.u32 %v201, 7
    %v203 = vsub.s32 0, %v202
    %v204 = vrot.slane %v199, %v203
    %v206 = vsub.f32 %v198, %v204
    %v207 = vmul.f32 %v206, %v206
    %v208 = vmul.f32 %v207, -4.0
    %v209 = vmul.f32 %v208, 1.442695
    %v210 = vpow.pop %v209
    %v211 = vld [vmem:[#allocation2] sm:$0xff]
    %v212 = vpack.c.bf16 %v210, %v210
    %v213 = vld [vmem:[#allocation8] sm:$0xf]
    %v214 = vld [vmem:[#allocation8 + $0x4] sm:$0xf]
    %v215 = vld [vmem:[#allocation8 + $0x8] sm:$0xf]
    %v216 = vld [vmem:[#allocation8 + $0xc] sm:$0xf]
    %v217 = vld [vmem:[#allocation8 + $0x10] sm:$0xf]
    %v218 = vld [vmem:[#allocation8 + $0x14] sm:$0xf]
    %v219 = vld [vmem:[#allocation8 + $0x18] sm:$0xf]
    %v220 = vld [vmem:[#allocation8 + $0x1c] sm:$0xf]
    %v221 = vld [vmem:[#allocation8 + $0x20] sm:$0xf]
    %v222 = vld [vmem:[#allocation8 + $0x24] sm:$0xf]
    %v223 = vld [vmem:[#allocation8 + $0x28] sm:$0xf]
    %v224 = vld [vmem:[#allocation8 + $0x2c] sm:$0xf]
    %v225 = vld [vmem:[#allocation8 + $0x30] sm:$0xf]
    %v226 = vld [vmem:[#allocation8 + $0x34] sm:$0xf]
    %v227 = vld [vmem:[#allocation8 + $0x38] sm:$0xf]
    %v228 = vld [vmem:[#allocation8 + $0x3c] sm:$0xf]
    %v245 = vunpack.c.l.b16 %v213
    %v246 = vunpack.c.l.b16 %v214
    %v247 = vunpack.c.l.b16 %v215
    %v248 = vunpack.c.l.b16 %v216
    %v249 = vunpack.c.l.b16 %v217
    %v250 = vunpack.c.l.b16 %v218
    %v251 = vunpack.c.l.b16 %v219
    %v252 = vunpack.c.l.b16 %v220
    %v253 = vunpack.c.l.b16 %v221
    %v254 = vunpack.c.l.b16 %v222
    %v255 = vunpack.c.l.b16 %v223
    %v256 = vunpack.c.l.b16 %v224
    %v257 = vunpack.c.l.b16 %v225
    %v258 = vunpack.c.l.b16 %v226
    %v259 = vunpack.c.l.b16 %v227
    %v260 = vunpack.c.l.b16 %v228
    %v261 = vpack.c.b16 %v246, %v245
    %v262 = vpack.c.b16 %v248, %v247
    %v263 = vpack.c.b16 %v250, %v249
    %v264 = vpack.c.b16 %v252, %v251
    %v265 = vpack.c.b16 %v254, %v253
    %v266 = vpack.c.b16 %v256, %v255
    %v267 = vpack.c.b16 %v258, %v257
    %v268 = vpack.c.b16 %v260, %v259
    %277 = vmatprep.subr.bf16.mxu0 0
    %278 = vmatpush1.bf16.msra.mxu0 %v268
    %279 = vmatprep.subr.bf16.mxu0 0
    %280 = vmatpush1.bf16.msra.mxu0 %v267
    %281 = vmatprep.subr.bf16.mxu0 0
    %282 = vmatpush1.bf16.msra.mxu0 %v266
    %283 = vmatprep.subr.bf16.mxu0 0
    %284 = vmatpush1.bf16.msra.mxu0 %v265
    %285 = vmatprep.subr.bf16.mxu0 0
    %286 = vmatpush1.bf16.msra.mxu0 %v264
    %287 = vmatprep.subr.bf16.mxu0 0
    %288 = vmatpush1.bf16.msra.mxu0 %v263
    %289 = vmatprep.subr.bf16.mxu0 0
    %290 = vmatpush1.bf16.msra.mxu0 %v262
    %291 = vmatprep.subr.bf16.mxu0 0
    %292 = vmatpush1.bf16.msra.mxu0 %v261
    %293 = vmatprep.subr.bf16.mxu0 0
    %294 = vmatpush2.bf16.msra.mxu0 0
    %295 = vmatprep.subr.bf16.mxu0 0
    %296 = vmatpush2.bf16.msra.mxu0 0
    %297 = vmatprep.subr.bf16.mxu0 0
    %298 = vmatpush2.bf16.msra.mxu0 0
    %299 = vmatprep.subr.bf16.mxu0 0
    %300 = vmatpush2.bf16.msra.mxu0 0
    %301 = vmatprep.subr.bf16.mxu0 0
    %302 = vmatpush2.bf16.msra.mxu0 0
    %303 = vmatprep.subr.bf16.mxu0 0
    %304 = vmatpush2.bf16.msra.mxu0 0
    %305 = vmatprep.subr.bf16.mxu0 0
    %306 = vmatpush2.bf16.msra.mxu0 0
    %307 = vmatprep.subr.bf16.mxu0 0
    %308 = vmatpush2.bf16.msra.mxu0 0
    %309 = vmatprep.mubr.bf16.mxu0 0
    %310 = vmatmul.mubr.bf16.gmra.mxu0 %v212
    %v311 = vpop.f32.mrf.mxu0
    %v312 = vadd.f32 0.0, %v311
    %v313 = vpop.f32.mrf.mxu0
    %v314 = vpop.f32.mrf.mxu0
    %v315 = vpop.f32.mrf.mxu0
    %316 = vdwg.mxu0
    %v317 = vadd.f32 %v211, %v312
    %318 = vst [vmem:[#allocation2] sm:$0xff] %v317
    // Predicated region
    $region46: #{tpu_custom_call.1} parent=1 // pred_check
      %p319 = pneg %p67
    $region47: #{tpu_custom_call.1} parent=1 // pred_check_branch
      %321 = sbr.rel (%p319) target = $region49
    $region48: #{tpu_custom_call.1} parent=1 // pred_region
      %v322 = vld [vmem:[#allocation2] sm:$0xff]
      %v323 = vld [vmem:[%s6] sm:$0x1]
      %v325 = vlaneseq
      %v326 = vshrl.u32 %v325, 7
      %v327 = vsub.s32 0, %v326
      %v328 = vrot.slane %v323, %v327
      %v330 = vadd.f32 %v322, %v328
      %331 = vst [vmem:[#allocation9] sm:$0xff] %v330
    $region49: #{tpu_custom_call.1} parent=1 // pred_fallthru
      _
    // Predicated region
    $region50: #{tpu_custom_call.1} parent=1 // pred_check
      _
    $region51: #{tpu_custom_call.1} parent=1 // pred_check_branch
      %333 = sbr.rel (0) target = $region53
    $region52: #{tpu_custom_call.1} parent=1 // pred_region
      %s335 = ssub.s32 128, 128
      %336 = vsyncadd [#allocation5], %s335
      %s338 = sshll.u32 [#allocation9], 4
      %s339 = int_to_ptr.vmem [resolvable:$true] %s338
      %341 = dma.vmem_to_hbm [thread:$0]  %s339, 128, %s7, [#allocation5]
    $region53: #{tpu_custom_call.1} parent=1 // pred_fallthru
      _
    // Predicated region
    $region54: #{tpu_custom_call.1} parent=1 // pred_check
      _
    $region55: #{tpu_custom_call.1} parent=1 // pred_check_branch
      %343 = sbr.rel (0) target = $region57
    $region56: #{tpu_custom_call.1} parent=1 // pred_region
      %344 = dma.done [#allocation5], 128
    $region57: #{tpu_custom_call.1} parent=1 // pred_fallthru
      _
    %345 = vsyncpa [#allocation4], 1
    %346 = vsyncpa [#allocation7], 1
    %347 = vsyncpa [#allocation5], 1

</llo_original>
